<compile_context>
chip_gen: v7x
topology: tpu7x:2x2x1
jax: 0.10.0
libtpu: 0.0.40
codegen_flags: <defaults>
</compile_context>

<pallas_src>
import functools

import jax
import jax.numpy as jnp
from jax.experimental import pallas as pl
from jax.experimental.pallas import tpu as pltpu

PACK = 8  # nodes packed per 128-lane output row (8 * out_dim(16) = 128)


def _round_up(a: int, b: int) -> int:
    return pl.cdiv(a, b) * b


def _gnn_kernel(x_ref, w1_ref, b1_ref, w2_ref, b2_ref, o_ref):
    # Layer 1: (tile_r, 16) @ (16, 64) -> f32 accumulate on the MXU.
    h = jnp.dot(x_ref[...], w1_ref[...], preferred_element_type=jnp.float32)
    # Bias + ReLU in f32 on the VPU (v5e has no bf16 VPU).
    h = jnp.maximum(h + b1_ref[...], 0.0)
    # Layer 2: (tile_r, 64) @ (64, 128) -> f32 accumulate; cast activation to
    # the weight dtype so the bf16 MXU path is used when weights are bf16.
    y = jnp.dot(h.astype(w2_ref.dtype), w2_ref[...],
                preferred_element_type=jnp.float32)
    # Bias in f32, single cast at the store (f32 or bf16 output).
    o_ref[...] = (y + b2_ref[...]).astype(o_ref.dtype)


@functools.partial(jax.jit, static_argnames=("tile_rows", "use_bf16"))
def simple_gnn_forward(x, w1, b1, w2, b2, *, tile_rows: int = 512,
                       use_bf16: bool = False):
    """y = relu(x @ w1 + b1) @ w2 + b2.

    x: (N, in_dim=2) f32; w1: (2, 8); b1: (1, 8); w2: (8, 16); b2: (1, 16).
    Weights are stored (in_features, out_features), i.e. transposed vs torch.
    Returns (N, 16); f32 by default, bf16 if use_bf16=True (which also
    quantizes x and the weights to bf16 for the MXU; accumulation stays f32).
    """
    n, in_dim = x.shape
    hid = w1.shape[1]
    out_dim = w2.shape[1]
    assert in_dim == 2 and hid == 8 and out_dim == 16, "repacking assumes 2/8/16"

    compute_dtype = jnp.bfloat16 if use_bf16 else jnp.float32
    out_dtype = jnp.bfloat16 if use_bf16 else jnp.float32

    # --- Pack 8 nodes per row (only the node axis may need <=7 pad rows). ---
    n8 = _round_up(n, PACK)
    if n8 != n:
        x = jnp.pad(x, ((0, n8 - n), (0, 0)))
    r_rows = n8 // PACK
    x_packed = x.reshape(r_rows, PACK * in_dim).astype(compute_dtype)   # (R, 16)

    # --- Block-diagonal weights / tiled biases (tiny, VMEM-resident). -------
    eye = jnp.eye(PACK, dtype=jnp.float32)
    w1_bd = jnp.kron(eye, w1).astype(compute_dtype)        # (16, 64)
    w2_bd = jnp.kron(eye, w2).astype(compute_dtype)        # (64, 128)
    b1_bd = jnp.tile(b1, (1, PACK)).astype(jnp.float32)    # (1, 64)
    b2_bd = jnp.tile(b2, (1, PACK)).astype(jnp.float32)    # (1, 128)
    hid_p = PACK * hid          # 64
    out_p = PACK * out_dim      # 128
    in_p = PACK * in_dim        # 16

    # --- Row tile: big (low per-step overhead) but >= 2 grid steps when -----
    # --- possible so both v7x TensorCores get work. Ragged last block is ----
    # --- masked by Pallas (no wrapper pad/slice over the bulk data). --------
    if r_rows >= 8:
        half = _round_up(pl.cdiv(r_rows, 2), 8)
        tile_r = max(8, min(tile_rows, half))
    else:
        tile_r = r_rows  # full array dim (legal block shape)
    grid = (pl.cdiv(r_rows, tile_r),)

    in_itemsize = jnp.dtype(compute_dtype).itemsize
    out_itemsize = jnp.dtype(out_dtype).itemsize
    cost = pl.CostEstimate(
        flops=2 * r_rows * (in_p * hid_p + hid_p * out_p),
        transcendentals=0,
        bytes_accessed=(r_rows * in_p * in_itemsize                 # x read
                        + (in_p * hid_p + hid_p * out_p) * in_itemsize  # w1,w2
                        + (hid_p + out_p) * 4                       # b1, b2
                        + r_rows * out_p * out_itemsize),           # out write
    )

    resident = lambda shape: pl.BlockSpec(shape, lambda i: (0, 0))

    y_packed = pl.pallas_call(
        _gnn_kernel,
        out_shape=jax.ShapeDtypeStruct((r_rows, out_p), out_dtype),
        grid=grid,
        in_specs=[
            pl.BlockSpec((tile_r, in_p), lambda i: (i, 0)),  # x: tiled rows
            resident((in_p, hid_p)),                         # w1_bd
            resident((1, hid_p)),                            # b1_bd
            resident((hid_p, out_p)),                        # w2_bd
            resident((1, out_p)),                            # b2_bd
        ],
        out_specs=pl.BlockSpec((tile_r, out_p), lambda i: (i, 0)),
        compiler_params=pltpu.CompilerParams(
            dimension_semantics=("parallel",)),
        cost_estimate=cost,
    )(x_packed, w1_bd, b1_bd, w2_bd, b2_bd)

    # Free row-major unpack; slice only if N was not a multiple of 8.
    y = y_packed.reshape(n8, out_dim)
    if n8 != n:
        y = y[:n]
    return y


def init_params(key, input_dim=2, hidden_dim=8, output_dim=16):
    """PyTorch-style uniform(-1/sqrt(fan_in), 1/sqrt(fan_in)) init."""
    k1, k2, k3, k4 = jax.random.split(key, 4)
    bound1 = 1.0 / (input_dim ** 0.5)
    bound2 = 1.0 / (hidden_dim ** 0.5)
    w1 = jax.random.uniform(k1, (input_dim, hidden_dim), jnp.float32,
                            minval=-bound1, maxval=bound1)
    b1 = jax.random.uniform(k2, (1, hidden_dim), jnp.float32,
                            minval=-bound1, maxval=bound1)
    w2 = jax.random.uniform(k3, (hidden_dim, output_dim), jnp.float32,
                            minval=-bound2, maxval=bound2)
    b2 = jax.random.uniform(k4, (1, output_dim), jnp.float32,
                            minval=-bound2, maxval=bound2)
    return w1, b1, w2, b2


def _reference(x, w1, b1, w2, b2):
    return jnp.maximum(x @ w1 + b1, 0.0) @ w2 + b2


if __name__ == "__main__":
    key = jax.random.PRNGKey(0)
    k_x, k_x2, k_p = jax.random.split(key, 3)

    IN_DIM, HID, OUT = 2, 8, 16
    w1, b1, w2, b2 = init_params(k_p, IN_DIM, HID, OUT)

    # Small main check (multiple of 8 rows -> no pad/slice at all, 2 grid steps).
    N = 64
    x = jax.random.normal(k_x, (N, IN_DIM), jnp.float32)
    out = jax.block_until_ready(simple_gnn_forward(x, w1, b1, w2, b2))
    ref = _reference(x, w1, b1, w2, b2)
    assert out.shape == (N, OUT)
    assert jnp.allclose(out, ref, atol=1e-5, rtol=1e-5)

    # Ragged node count (exercises the <=7-row pad and the [:n] slice).
    N2 = 29
    x2 = jax.random.normal(k_x2, (N2, IN_DIM), jnp.float32)
    out2 = jax.block_until_ready(simple_gnn_forward(x2, w1, b1, w2, b2))
    ref2 = _reference(x2, w1, b1, w2, b2)
    assert out2.shape == (N2, OUT)
    assert jnp.allclose(out2, ref2, atol=1e-5, rtol=1e-5)

    # bf16 MXU + bf16 output path (f32 accumulation; x is quantized to bf16,
    # so tolerance reflects input quantization, not just matmul rounding).
    out_bf = jax.block_until_ready(
        simple_gnn_forward(x, w1, b1, w2, b2, use_bf16=True))
    assert out_bf.shape == (N, OUT) and out_bf.dtype == jnp.bfloat16
    assert jnp.allclose(out_bf.astype(jnp.float32), ref, atol=1e-1, rtol=1e-1)

    print("KERNEL_OK")
</pallas_src>

<mosaic_0001>
module attributes {stable_mosaic.version = 11 : i64} {
  func.func @_gnn_kernel(%arg0: i32, %arg1: memref<8x16xf32, #tpu.memory_space<vmem>>, %arg2: memref<16x64xf32, #tpu.memory_space<vmem>>, %arg3: memref<1x64xf32, #tpu.memory_space<vmem>>, %arg4: memref<64x128xf32, #tpu.memory_space<vmem>>, %arg5: memref<1x128xf32, #tpu.memory_space<vmem>>, %arg6: memref<8x128xf32, #tpu.memory_space<vmem>>) attributes {dimension_semantics = [#tpu.dimension_semantics<parallel>], iteration_bounds = array<i64: 1>, scalar_prefetch = 0 : i64, scratch_operands = 0 : i64, tpu.core_type = #tpu.core_type<tc>, window_params = [{transform_indices = @transform_0, window_bounds = array<i64: 8, 16>}, {pipeline_mode = #tpu.pipeline_mode<synchronous>, transform_indices = @transform_1, window_bounds = array<i64: 16, 64>}, {pipeline_mode = #tpu.pipeline_mode<synchronous>, transform_indices = @transform_2, window_bounds = array<i64: 1, 64>}, {pipeline_mode = #tpu.pipeline_mode<synchronous>, transform_indices = @transform_3, window_bounds = array<i64: 64, 128>}, {pipeline_mode = #tpu.pipeline_mode<synchronous>, transform_indices = @transform_4, window_bounds = array<i64: 1, 128>}, {transform_indices = @transform_5, window_bounds = array<i64: 8, 128>}]} {
    %c0 = arith.constant 0 : index
    %c0_0 = arith.constant 0 : index
    %0 = vector.load %arg1[%c0, %c0_0] : memref<8x16xf32, #tpu.memory_space<vmem>>, vector<8x16xf32>
    %c0_1 = arith.constant 0 : index
    %c0_2 = arith.constant 0 : index
    %1 = vector.load %arg2[%c0_1, %c0_2] : memref<16x64xf32, #tpu.memory_space<vmem>>, vector<16x64xf32>
    %cst = arith.constant dense<0.000000e+00> : vector<8x64xf32>
    %2 = tpu.matmul %0, %1, %cst {dimension_numbers = #tpu.dot_dimension_numbers<[1], [0], [0], [1], [0, 0, 1, 1], [], []>} : vector<8x16xf32>, vector<16x64xf32>, vector<8x64xf32> -> vector<8x64xf32>
    %c0_3 = arith.constant 0 : index
    %c0_4 = arith.constant 0 : index
    %3 = vector.load %arg3[%c0_3, %c0_4] : memref<1x64xf32, #tpu.memory_space<vmem>>, vector<1x64xf32>
    %4 = vector.broadcast %3 : vector<1x64xf32> to vector<8x64xf32>
    %5 = arith.addf %2, %4 : vector<8x64xf32>
    %cst_5 = arith.constant 0.000000e+00 : f32
    %6 = vector.broadcast %cst_5 : f32 to vector<8x64xf32>
    %7 = arith.maximumf %5, %6 : vector<8x64xf32>
    %c0_6 = arith.constant 0 : index
    %c0_7 = arith.constant 0 : index
    %8 = vector.load %arg4[%c0_6, %c0_7] : memref<64x128xf32, #tpu.memory_space<vmem>>, vector<64x128xf32>
    %cst_8 = arith.constant dense<0.000000e+00> : vector<8x128xf32>
    %9 = tpu.matmul %7, %8, %cst_8 {dimension_numbers = #tpu.dot_dimension_numbers<[1], [0], [0], [1], [0, 0, 1, 1], [], []>} : vector<8x64xf32>, vector<64x128xf32>, vector<8x128xf32> -> vector<8x128xf32>
    %c0_9 = arith.constant 0 : index
    %c0_10 = arith.constant 0 : index
    %10 = vector.load %arg5[%c0_9, %c0_10] : memref<1x128xf32, #tpu.memory_space<vmem>>, vector<1x128xf32>
    %11 = vector.broadcast %10 : vector<1x128xf32> to vector<8x128xf32>
    %12 = arith.addf %9, %11 : vector<8x128xf32>
    %c0_11 = arith.constant 0 : index
    %c0_12 = arith.constant 0 : index
    %13 = vector.load %arg6[%c0_11, %c0_12] : memref<8x128xf32, #tpu.memory_space<vmem>>, vector<8x128xf32>
    tpu.vector_store %arg6[%c0_11, %c0_12], %12 {strides = array<i32>} : memref<8x128xf32, #tpu.memory_space<vmem>>, vector<8x128xf32>,
    return
  }
  func.func @transform_0(%arg0: i32) -> (i32, i32) {
    %c0_i32 = arith.constant 0 : i32
    %c0_i32_0 = arith.constant 0 : i32
    return %arg0, %c0_i32 : i32, i32
  }
  func.func @transform_1(%arg0: i32) -> (i32, i32) {
    %c0_i32 = arith.constant 0 : i32
    %c0_i32_0 = arith.constant 0 : i32
    %c0_i32_1 = arith.constant 0 : i32
    return %c0_i32, %c0_i32_0 : i32, i32
  }
  func.func @transform_2(%arg0: i32) -> (i32, i32) {
    %c0_i32 = arith.constant 0 : i32
    %c0_i32_0 = arith.constant 0 : i32
    %c0_i32_1 = arith.constant 0 : i32
    return %c0_i32, %c0_i32_0 : i32, i32
  }
  func.func @transform_3(%arg0: i32) -> (i32, i32) {
    %c0_i32 = arith.constant 0 : i32
    %c0_i32_0 = arith.constant 0 : i32
    %c0_i32_1 = arith.constant 0 : i32
    return %c0_i32, %c0_i32_0 : i32, i32
  }
  func.func @transform_4(%arg0: i32) -> (i32, i32) {
    %c0_i32 = arith.constant 0 : i32
    %c0_i32_0 = arith.constant 0 : i32
    %c0_i32_1 = arith.constant 0 : i32
    return %c0_i32, %c0_i32_0 : i32, i32
  }
  func.func @transform_5(%arg0: i32) -> (i32, i32) {
    %c0_i32 = arith.constant 0 : i32
    %c0_i32_0 = arith.constant 0 : i32
    return %arg0, %c0_i32 : i32, i32
  }
}

</mosaic_0001>

<llo_original>
// kernel: simple_gnn_forward.1
$region0: #{simple_gnn_forward.1}
  #allocation0 [shape = 'u32[]', space=smem, size = 0x4, offset = 0x4, fixed_abs, tag = 'smem constant byte address 0x4 - core index']
  #allocation1 [shape = 'u32[144,128]{1,0:T(1,128)}', space=vmem, size = 0x12000, scoped, tag = 'internal scratch']
  %s0 = inlined_call_operand.vmem [shape: f32[8,16], index: 0, kind: input, shape index: {}]
  %s1 = inlined_call_operand.vmem [shape: f32[16,64], index: 1, kind: input, shape index: {}]
  %s2 = inlined_call_operand.vmem [shape: f32[1,64], index: 2, kind: input, shape index: {}]
  %s3 = inlined_call_operand.vmem [shape: f32[64,128], index: 3, kind: input, shape index: {}]
  %s4 = inlined_call_operand.vmem [shape: f32[1,128], index: 4, kind: input, shape index: {}]
  %s5 = inlined_call_operand.vmem [shape: f32[8,128], index: 5, kind: output, shape index: {}]
  %s6 = sld [smem:[#allocation0]]
  $region30: #{simple_gnn_forward.1} parent=0
    _
  %s8 = ssub.s32 1, %s6
  %s9 = scalar_select 0, %s8, %s6
  // Predicated region
  $region2: #{simple_gnn_forward.1} parent=0 // pred_check
    _
  $region3: #{simple_gnn_forward.1} parent=0 // pred_check_branch
    %11 = sbr.rel (0) target = $region5
  $region4: #{simple_gnn_forward.1} parent=0 // pred_region
    _
  $region5: #{simple_gnn_forward.1} parent=0 // pred_fallthru
    _
  // Predicated region
  $region6: #{simple_gnn_forward.1} parent=0 // pred_check
    _
  $region7: #{simple_gnn_forward.1} parent=0 // pred_check_branch
    %13 = sbr.rel (0) target = $region9
  $region8: #{simple_gnn_forward.1} parent=0 // pred_region
    _
  $region9: #{simple_gnn_forward.1} parent=0 // pred_fallthru
    _
  // Predicated region
  $region10: #{simple_gnn_forward.1} parent=0 // pred_check
    _
  $region11: #{simple_gnn_forward.1} parent=0 // pred_check_branch
    %15 = sbr.rel (0) target = $region13
  $region12: #{simple_gnn_forward.1} parent=0 // pred_region
    _
  $region13: #{simple_gnn_forward.1} parent=0 // pred_fallthru
    _
  // Predicated region
  $region14: #{simple_gnn_forward.1} parent=0 // pred_check
    _
  $region15: #{simple_gnn_forward.1} parent=0 // pred_check_branch
    %17 = sbr.rel (0) target = $region17
  $region16: #{simple_gnn_forward.1} parent=0 // pred_region
    _
  $region17: #{simple_gnn_forward.1} parent=0 // pred_fallthru
    _
  // Predicated region
  $region18: #{simple_gnn_forward.1} parent=0 // pred_check
    _
  $region19: #{simple_gnn_forward.1} parent=0 // pred_check_branch
    %19 = sbr.rel (0) target = $region21
  $region20: #{simple_gnn_forward.1} parent=0 // pred_region
    _
  $region21: #{simple_gnn_forward.1} parent=0 // pred_fallthru
    _
  %v20 = vld [vmem:[%s0] sm:$0xff]
  %v21 = vld [vmem:[%s1] sm:$0xff]
  %v22 = vld [vmem:[%s1 + $0x8] sm:$0xff]
  %v23 = vld [vmem:[%s2] sm:$0x1]
  %v25 = vlaneseq
  %v26 = vshrl.u32 %v25, 7
  %v27 = vsub.s32 0, %v26
  %v28 = vrot.slane %v23, %v27
  %vm30 = vcmask 130048
  %v32 = vsel %vm30, %v20, 0
  %34 = vmatprep.subr.mxu0 0.0
  %35 = vmatpush1.msra.mxu0 %v21
  %36 = vmatprep.subr.mxu0 0.0
  %37 = vmatpush1.msra.mxu0 %v22
  %38 = vmatprep.subr.mxu0 0.0
  %39 = vmatpush1.msra.mxu0 0.0
  %40 = vmatprep.subr.mxu0 0.0
  %41 = vmatpush1.msra.mxu0 0.0
  %42 = vmatprep.subr.mxu0 0.0
  %43 = vmatpush1.msra.mxu0 0.0
  %44 = vmatprep.subr.mxu0 0.0
  %45 = vmatpush1.msra.mxu0 0.0
  %46 = vmatprep.subr.mxu0 0.0
  %47 = vmatpush1.msra.mxu0 0.0
  %48 = vmatprep.subr.mxu0 0.0
  %49 = vmatpush1.msra.mxu0 0.0
  %50 = vmatprep.subr.mxu0 0.0
  %51 = vmatpush1.msra.mxu0 0.0
  %52 = vmatprep.subr.mxu0 0.0
  %53 = vmatpush1.msra.mxu0 0.0
  %54 = vmatprep.subr.mxu0 0.0
  %55 = vmatpush1.msra.mxu0 0.0
  %56 = vmatprep.subr.mxu0 0.0
  %57 = vmatpush1.msra.mxu0 0.0
  %58 = vmatprep.subr.mxu0 0.0
  %59 = vmatpush1.msra.mxu0 0.0
  %60 = vmatprep.subr.mxu0 0.0
  %61 = vmatpush1.msra.mxu0 0.0
  %62 = vmatprep.subr.mxu0 0.0
  %63 = vmatpush1.msra.mxu0 0.0
  %64 = vmatprep.subr.mxu0 0.0
  %65 = vmatpush1.msra.mxu0 0.0
  %66 = vmatprep.subr.mxu0 0.0
  %67 = vmatpush1.msra.mxu0 0.0
  %68 = vmatprep.subr.mxu0 0.0
  %69 = vmatpush1.msra.mxu0 0.0
  %70 = vmatprep.subr.mxu0 0.0
  %71 = vmatpush1.msra.mxu0 0.0
  %72 = vmatprep.subr.mxu0 0.0
  %73 = vmatpush1.msra.mxu0 0.0
  %74 = vmatprep.subr.mxu0 0.0
  %75 = vmatpush1.msra.mxu0 0.0
  %76 = vmatprep.subr.mxu0 0.0
  %77 = vmatpush1.msra.mxu0 0.0
  %78 = vmatprep.subr.mxu0 0.0
  %79 = vmatpush1.msra.mxu0 0.0
  %80 = vmatprep.subr.mxu0 0.0
  %81 = vmatpush1.msra.mxu0 0.0
  %82 = vmatprep.subr.mxu0 0.0
  %83 = vmatpush1.msra.mxu0 0.0
  %84 = vmatprep.subr.mxu0 0.0
  %85 = vmatpush1.msra.mxu0 0.0
  %86 = vmatprep.subr.mxu0 0.0
  %87 = vmatpush1.msra.mxu0 0.0
  %88 = vmatprep.subr.mxu0 0.0
  %89 = vmatpush1.msra.mxu0 0.0
  %90 = vmatprep.subr.mxu0 0.0
  %91 = vmatpush1.msra.mxu0 0.0
  %92 = vmatprep.subr.mxu0 0.0
  %93 = vmatpush1.msra.mxu0 0.0
  %94 = vmatprep.subr.mxu0 0.0
  %95 = vmatpush1.msra.mxu0 0.0
  %96 = vmatprep.subr.mxu0 0.0
  %97 = vmatpush1.msra.mxu0 0.0
  %98 = vmatprep.mubr.f32.mxu0 0.0
  %99 = vmatmul.mubr.f32.gmra.mrb[0].mxu0 %v32
  %v100 = vpop.f32.mrb[0].mxu0
  %v101 = vadd.f32 %v28, %v100
  %v102 = vpop.f32.mrb[0].mxu0
  %103 = vdwg.mxu0
  %v104 = vmax.f32 %v101, 0.0
  %v105 = vld [vmem:[%s3] sm:$0xff]
  %v106 = vld [vmem:[%s3 + $0x8] sm:$0xff]
  %v107 = vld [vmem:[%s3 + $0x10] sm:$0xff]
  %v108 = vld [vmem:[%s3 + $0x18] sm:$0xff]
  %v109 = vld [vmem:[%s3 + $0x20] sm:$0xff]
  %v110 = vld [vmem:[%s3 + $0x28] sm:$0xff]
  %v111 = vld [vmem:[%s3 + $0x30] sm:$0xff]
  %v112 = vld [vmem:[%s3 + $0x38] sm:$0xff]
  %v113 = vld [vmem:[%s4] sm:$0x1]
  %v115 = vlaneseq
  %v116 = vshrl.u32 %v115, 7
  %v117 = vsub.s32 0, %v116
  %v118 = vrot.slane %v113, %v117
  %vm120 = vcmask 523264
  %v122 = vsel %vm120, %v104, 0
  %124 = vmatprep.subr.mxu0 0.0
  %125 = vmatpush1.msra.mxu0 %v105
  %126 = vmatprep.subr.mxu0 0.0
  %127 = vmatpush1.msra.mxu0 %v106
  %128 = vmatprep.subr.mxu0 0.0
  %129 = vmatpush1.msra.mxu0 %v107
  %130 = vmatprep.subr.mxu0 0.0
  %131 = vmatpush1.msra.mxu0 %v108
  %132 = vmatprep.subr.mxu0 0.0
  %133 = vmatpush1.msra.mxu0 %v109
  %134 = vmatprep.subr.mxu0 0.0
  %135 = vmatpush1.msra.mxu0 %v110
  %136 = vmatprep.subr.mxu0 0.0
  %137 = vmatpush1.msra.mxu0 %v111
  %138 = vmatprep.subr.mxu0 0.0
  %139 = vmatpush1.msra.mxu0 %v112
  %140 = vmatprep.subr.mxu0 0.0
  %141 = vmatpush1.msra.mxu0 0.0
  %142 = vmatprep.subr.mxu0 0.0
  %143 = vmatpush1.msra.mxu0 0.0
  %144 = vmatprep.subr.mxu0 0.0
  %145 = vmatpush1.msra.mxu0 0.0
  %146 = vmatprep.subr.mxu0 0.0
  %147 = vmatpush1.msra.mxu0 0.0
  %148 = vmatprep.subr.mxu0 0.0
  %149 = vmatpush1.msra.mxu0 0.0
  %150 = vmatprep.subr.mxu0 0.0
  %151 = vmatpush1.msra.mxu0 0.0
  %152 = vmatprep.subr.mxu0 0.0
  %153 = vmatpush1.msra.mxu0 0.0
  %154 = vmatprep.subr.mxu0 0.0
  %155 = vmatpush1.msra.mxu0 0.0
  %156 = vmatprep.subr.mxu0 0.0
  %157 = vmatpush1.msra.mxu0 0.0
  %158 = vmatprep.subr.mxu0 0.0
  %159 = vmatpush1.msra.mxu0 0.0
  %160 = vmatprep.subr.mxu0 0.0
  %161 = vmatpush1.msra.mxu0 0.0
  %162 = vmatprep.subr.mxu0 0.0
  %163 = vmatpush1.msra.mxu0 0.0
  %164 = vmatprep.subr.mxu0 0.0
  %165 = vmatpush1.msra.mxu0 0.0
  %166 = vmatprep.subr.mxu0 0.0
  %167 = vmatpush1.msra.mxu0 0.0
  %168 = vmatprep.subr.mxu0 0.0
  %169 = vmatpush1.msra.mxu0 0.0
  %170 = vmatprep.subr.mxu0 0.0
  %171 = vmatpush1.msra.mxu0 0.0
  %172 = vmatprep.subr.mxu0 0.0
  %173 = vmatpush1.msra.mxu0 0.0
  %174 = vmatprep.subr.mxu0 0.0
  %175 = vmatpush1.msra.mxu0 0.0
  %176 = vmatprep.subr.mxu0 0.0
  %177 = vmatpush1.msra.mxu0 0.0
  %178 = vmatprep.subr.mxu0 0.0
  %179 = vmatpush1.msra.mxu0 0.0
  %180 = vmatprep.subr.mxu0 0.0
  %181 = vmatpush1.msra.mxu0 0.0
  %182 = vmatprep.subr.mxu0 0.0
  %183 = vmatpush1.msra.mxu0 0.0
  %184 = vmatprep.subr.mxu0 0.0
  %185 = vmatpush1.msra.mxu0 0.0
  %186 = vmatprep.subr.mxu0 0.0
  %187 = vmatpush1.msra.mxu0 0.0
  %188 = vmatprep.mubr.f32.mxu0 0.0
  %189 = vmatmul.mubr.f32.gmra.mrb[0].mxu0 %v122
  %v190 = vpop.f32.mrb[0].mxu0
  %v191 = vadd.f32 %v118, %v190
  %v192 = vpop.f32.mrb[0].mxu0
  %193 = vdwg.mxu0
  %194 = vst [vmem:[%s5] sm:$0xff] %v191
  // Predicated region
  $region22: #{simple_gnn_forward.1} parent=0 // pred_check
    _
  $region23: #{simple_gnn_forward.1} parent=0 // pred_check_branch
    %196 = sbr.rel (0) target = $region25
  $region24: #{simple_gnn_forward.1} parent=0 // pred_region
    _
  $region25: #{simple_gnn_forward.1} parent=0 // pred_fallthru
    _
  // Predicated region
  $region26: #{simple_gnn_forward.1} parent=0 // pred_check
    _
  $region27: #{simple_gnn_forward.1} parent=0 // pred_check_branch
    %198 = sbr.rel (0) target = $region29
  $region28: #{simple_gnn_forward.1} parent=0 // pred_region
    _
  $region29: #{simple_gnn_forward.1} parent=0 // pred_fallthru
    _

</llo_original>
